<compile_context>
chip_gen: v7x
topology: tpu7x:2x2x1
jax: 0.10.0
libtpu: 0.0.40
codegen_flags: <defaults>
</compile_context>

<pallas_src>
import functools
import re

import jax
import jax.numpy as jnp
from jax.experimental import pallas as pl
from jax.experimental.pallas import tpu as pltpu


def _round_up(x, m):
    return (x + m - 1) // m * m


def _cdiv(a, b):
    return -(-a // b)


def _tpu_generation():
    """Best-effort TPU generation from device_kind (e.g. 'TPU v5 lite' -> 5)."""
    try:
        kind = jax.devices()[0].device_kind
    except Exception:
        return 6
    m = re.search(r"(\d+)", kind)
    return int(m.group(1)) if m else 6


def _vmem_params(gen):
    """(tile-choice budget, scoped-VMEM ceiling) per TPU generation."""
    if gen >= 7:        # v7x: 64 MiB physical VMEM per TensorCore
        return 24 << 20, 52 << 20
    if gen == 6:        # v6e: 128 MiB physical, 32 MiB default scoped
        return 48 << 20, 96 << 20
    if gen == 5:        # v5e: 128 MiB physical, 16 MiB default scoped
        return 32 << 20, 72 << 20
    return 8 << 20, None


def _per_pixel_vmem_bytes(c, itemsize, defer_select, logit_buffers):
    """VMEM bytes per pixel of tile: pipelined input buffers + f32 accumulators."""
    n_big_acc = 3 if defer_select else 2            # inter, denom [, xsel]
    return (logit_buffers * c * itemsize            # logits (multi-buffered)
            + 2 * 4                                 # int32 targets (double-buffered)
            + 4                                     # CE lane-partials
            + 4 * c * n_big_acc)                    # per-class lane-partials


def _choose_tile(hw, per_px, budget, max_tile_pixels=None):
    """Largest lane-dense (multiple-of-128) pixel tile fitting the VMEM budget,
    balanced so the masked tail tile wastes as little work as possible."""
    cap = max(128, budget // per_px)
    cap = min(cap, 32768)
    if max_tile_pixels is not None:
        cap = min(cap, max(128, max_tile_pixels))
    cap = max(128, (cap // 128) * 128)
    num_tiles = _cdiv(hw, cap)
    tile = _round_up(_cdiv(hw, num_tiles), 128)
    return tile, _cdiv(hw, tile)


def _ce_dice_kernel(x_ref, t_ref, ce_ref, inter_ref, denom_ref, *acc_refs,
                    hw, tile_hw, tiles_per_split, defer_select, needs_mask):
    s = pl.program_id(0)            # pixel-range split (parallel, megacore)
    j = pl.program_id(2)            # pixel-tile index within the split (reduction)

    if defer_select:
        ce_acc, inter_acc, denom_acc, xsel_acc = acc_refs
    else:
        ce_acc, inter_acc, denom_acc = acc_refs
        xsel_acc = None

    @pl.when(j == 0)
    def _init():
        ce_acc[...] = jnp.zeros_like(ce_acc)
        inter_acc[...] = jnp.zeros_like(inter_acc)
        denom_acc[...] = jnp.zeros_like(denom_acc)
        if defer_select:
            xsel_acc[...] = jnp.zeros_like(xsel_acc)

    x = x_ref[0].astype(jnp.float32)                # (C, TW): classes on sublanes
    t = t_ref[0]                                    # (1, TW) int32 targets
    c, tw = x.shape

    class_ids = jax.lax.broadcasted_iota(jnp.int32, (c, tw), 0)
    onehot_b = t == class_ids                       # (C, TW) bool

    if needs_mask:
        # Logical pixel offset of this tile.  Fully out-of-range split-padding
        # tiles are clamped to the last physical block by the index_map, so the
        # mask must use the LOGICAL position, not the block actually loaded.
        start = (s * tiles_per_split + j) * tile_hw
        pos = jax.lax.broadcasted_iota(jnp.int32, (1, tw), 1)
        valid_b = (pos + start) < hw                # (1, TW) bool
        valid = valid_b.astype(jnp.float32)
        # Tail blocks load unspecified data; sanitize so inf/nan can't poison
        # the masked (x0) contributions.
        x = jnp.where(valid_b, x, 0.0)
        onehot = jnp.logical_and(onehot_b, valid_b).astype(jnp.float32)
    else:
        valid = None
        onehot = onehot_b.astype(jnp.float32)

    # Numerically-stable softmax / log-sum-exp over the class (sublane) axis.
    m = jnp.max(x, axis=0, keepdims=True)           # (1, TW)  XLU
    e = jnp.exp(x - m)                              # (C, TW)  EUP
    ssum = jnp.sum(e, axis=0, keepdims=True)        # (1, TW)  XLU
    probs = e * pl.reciprocal(ssum, approx=False)   # exact (loss parity w/ ref)
    lse = m + jnp.log(ssum)                         # (1, TW)

    xsel = x * onehot                               # logit at the target class
    if defer_select:
        # v6e/v7x (2 XLU ports): skip the per-step class-axis select-sum;
        # accumulate lane-parallel, reduce once in finalize.
        ce_acc[...] += lse * valid if needs_mask else lse
        xsel_acc[...] += xsel
    else:
        # v5e (1 vector-store slot): keep the in-step reduce and avoid the
        # extra (C, TW) accumulator read-modify-write.
        ce_px = lse - jnp.sum(xsel, axis=0, keepdims=True)
        ce_acc[...] += ce_px * valid if needs_mask else ce_px

    inter_acc[...] += probs * onehot                # per-class intersection
    if needs_mask:
        denom_acc[...] += probs * valid + onehot    # merged psum + ysum
    else:
        denom_acc[...] += probs + onehot

    @pl.when(j == pl.num_programs(2) - 1)
    def _finalize():
        ce_sum = jnp.sum(ce_acc[...], axis=1, keepdims=True)              # (1, 1)
        if defer_select:
            xs = jnp.sum(xsel_acc[...], axis=1, keepdims=True)            # (C, 1)
            ce_sum = ce_sum - jnp.sum(xs, axis=0, keepdims=True)          # (1, 1)
        ce_ref[0, 0] = ce_sum
        inter_ref[0, 0] = jnp.sum(inter_acc[...], axis=1, keepdims=True)  # (C, 1)
        denom_ref[0, 0] = jnp.sum(denom_acc[...], axis=1, keepdims=True)  # (C, 1)


def cross_entropy_dice_loss(x, targets, *, weight_ce=0.5, weight_dl=1.0, smooth=1.0,
                            defer_select=None, pixel_splits=None, max_tile_pixels=None):
    """x: [N, C, H, W] float logits (NCHW, as in PyTorch); targets: [N, H, W] int."""
    n, c, h, w = x.shape
    hw = h * w
    gen = _tpu_generation()
    if defer_select is None:
        defer_select = gen >= 6          # defer CE select-sum on 2-XLU-port chips
    budget, ceiling = _vmem_params(gen)

    itemsize = jnp.dtype(x.dtype).itemsize
    logit_buffers = 3 if (gen == 6 and c >= 64) else 2   # hide HBM jitter at big C
    per_px = _per_pixel_vmem_bytes(c, itemsize, defer_select, logit_buffers)
    tile_hw, phys_tiles = _choose_tile(hw, per_px, budget, max_tile_pixels)

    if pixel_splits is None:
        # v7x megacore: N==1 / odd N would leave a TensorCore idle; split each
        # image's pixel range across a leading parallel axis instead.
        pixel_splits = 2 if (gen >= 7 and n % 2 == 1 and phys_tiles >= 2) else 1
    pixel_splits = max(1, min(pixel_splits, phys_tiles))
    tiles_per_split = _cdiv(phys_tiles, pixel_splits)
    needs_mask = (phys_tiles * tile_hw != hw) or (pixel_splits * tiles_per_split != phys_tiles)

    # No wrapper-side padding: free reshape of contiguous NCHW, tails masked in-kernel.
    x_nc = x.reshape(n, c, hw)
    t_nc = targets.reshape(n, 1, hw).astype(jnp.int32)

    last_block = phys_tiles - 1

    def pix_block(s, j):
        # Split-padding tiles past the image end are clamped to the last
        # physical block; their pixels are fully masked inside the kernel.
        return jnp.minimum(s * tiles_per_split + j, last_block)

    logits_idx = lambda s, i, j: (i, 0, pix_block(s, j))
    targets_idx = lambda s, i, j: (i, 0, pix_block(s, j))
    if logit_buffers > 2:
        logits_spec = pl.BlockSpec((1, c, tile_hw), logits_idx,
                                   pipeline_mode=pl.Buffered(logit_buffers))
    else:
        logits_spec = pl.BlockSpec((1, c, tile_hw), logits_idx)

    scratch = [pltpu.VMEM((1, tile_hw), jnp.float32),    # CE lane-partials
               pltpu.VMEM((c, tile_hw), jnp.float32),    # intersection lane-partials
               pltpu.VMEM((c, tile_hw), jnp.float32)]    # probs-sum + onehot-sum (merged)
    if defer_select:
        scratch.append(pltpu.VMEM((c, tile_hw), jnp.float32))  # deferred x*onehot

    footprint = per_px * tile_hw
    compiler_kwargs = dict(dimension_semantics=("parallel", "parallel", "arbitrary"))
    if ceiling is not None:
        compiler_kwargs["vmem_limit_bytes"] = int(
            min(ceiling, max(footprint + (8 << 20), 32 << 20)))

    kernel = functools.partial(
        _ce_dice_kernel, hw=hw, tile_hw=tile_hw, tiles_per_split=tiles_per_split,
        defer_select=defer_select, needs_mask=needs_mask)

    ce_p, inter_p, denom_p = pl.pallas_call(
        kernel,
        out_shape=(
            jax.ShapeDtypeStruct((pixel_splits, n, 1, 1), jnp.float32),  # CE sum
            jax.ShapeDtypeStruct((pixel_splits, n, c, 1), jnp.float32),  # intersection
            jax.ShapeDtypeStruct((pixel_splits, n, c, 1), jnp.float32),  # psum + ysum
        ),
        grid_spec=pltpu.PrefetchScalarGridSpec(
            num_scalar_prefetch=0,
            grid=(pixel_splits, n, tiles_per_split),
            in_specs=[
                logits_spec,
                pl.BlockSpec((1, 1, tile_hw), targets_idx),
            ],
            out_specs=[
                pl.BlockSpec((1, 1, 1, 1), lambda s, i, j: (s, i, 0, 0)),
                pl.BlockSpec((1, 1, c, 1), lambda s, i, j: (s, i, 0, 0)),
                pl.BlockSpec((1, 1, c, 1), lambda s, i, j: (s, i, 0, 0)),
            ],
            scratch_shapes=scratch),
        compiler_params=pltpu.CompilerParams(**compiler_kwargs),
    )(x_nc, t_nc)

    # Tiny final combine in JAX (a few dozen floats).
    ce = jnp.sum(ce_p) / jnp.float32(n * hw)         # mean over real pixels
    inter = jnp.sum(inter_p, axis=(0, 1, 3))         # (C,)
    denom = jnp.sum(denom_p, axis=(0, 1, 3))         # (C,) == psum + ysum
    dice = 1.0 - (2.0 * inter + smooth) / (denom + smooth)
    # NOTE: the PyTorch module divides by (num_classes - 1); reproduced exactly
    # (undefined for C == 1, same as the reference module).
    dl = jnp.sum(dice) / jnp.float32(c - 1)
    return weight_ce * ce + weight_dl * dl


def _reference(x, targets, weight_ce=0.5, weight_dl=1.0, smooth=1.0):
    """Pure-JAX reference reproducing the PyTorch module."""
    n, c, h, w = x.shape
    logp = jax.nn.log_softmax(x, axis=1)
    onehot = (targets[:, None, :, :] ==
              jnp.arange(c)[None, :, None, None]).astype(jnp.float32)
    ce = -jnp.mean(jnp.sum(logp * onehot, axis=1))
    probs = jax.nn.softmax(x, axis=1)
    inter = jnp.sum(probs * onehot, axis=(0, 2, 3))
    psum = jnp.sum(probs, axis=(0, 2, 3))
    ysum = jnp.sum(onehot, axis=(0, 2, 3))
    dice = 1.0 - (2.0 * inter + smooth) / (psum + ysum + smooth)
    dl = jnp.sum(dice) / (c - 1)
    return weight_ce * ce + weight_dl * dl


if __name__ == "__main__":
    key = jax.random.PRNGKey(0)
    k1, k2, k3, k4 = jax.random.split(key, 4)

    # Main case (module-typical small shape), chip-default code path.
    N, C, H, W = 2, 4, 16, 16
    x = jax.random.normal(k1, (N, C, H, W), dtype=jnp.float32)
    targets = jax.random.randint(k2, (N, H, W), 0, C, dtype=jnp.int32)
    loss = jax.block_until_ready(cross_entropy_dice_loss(x, targets))
    ref = jax.block_until_ready(_reference(x, targets))
    assert jnp.allclose(loss, ref, rtol=1e-4, atol=1e-4), (loss, ref)

    # Coverage case: ragged pixel count (324 = 18*18, not a multiple of 128),
    # forced small tile, odd tile count with a leading pixel-split axis (tests
    # the clamped fully-masked tile) and BOTH kernel variants.
    N2, C2, H2, W2 = 1, 5, 18, 18
    x2 = jax.random.normal(k3, (N2, C2, H2, W2), dtype=jnp.float32)
    t2 = jax.random.randint(k4, (N2, H2, W2), 0, C2, dtype=jnp.int32)
    ref2 = jax.block_until_ready(_reference(x2, t2))
    for defer in (True, False):
        loss2 = jax.block_until_ready(
            cross_entropy_dice_loss(x2, t2, defer_select=defer,
                                    pixel_splits=2, max_tile_pixels=128))
        assert jnp.allclose(loss2, ref2, rtol=1e-4, atol=1e-4), (defer, loss2, ref2)

    print("KERNEL_OK")
</pallas_src>

<mosaic_0001>
module attributes {stable_mosaic.version = 11 : i64} {
  func.func @_ce_dice_kernel(%arg0: i32, %arg1: i32, %arg2: i32, %arg3: memref<1x4x256xf32, #tpu.memory_space<vmem>>, %arg4: memref<1x1x256xi32, #tpu.memory_space<vmem>>, %arg5: memref<1x1x1x1xf32, #tpu.memory_space<vmem>>, %arg6: memref<1x1x4x1xf32, #tpu.memory_space<vmem>>, %arg7: memref<1x1x4x1xf32, #tpu.memory_space<vmem>>, %arg8: memref<1x256xf32, #tpu.memory_space<vmem>>, %arg9: memref<4x256xf32, #tpu.memory_space<vmem>>, %arg10: memref<4x256xf32, #tpu.memory_space<vmem>>, %arg11: memref<4x256xf32, #tpu.memory_space<vmem>>) attributes {dimension_semantics = [#tpu.dimension_semantics<parallel>, #tpu.dimension_semantics<parallel>, #tpu.dimension_semantics<arbitrary>], iteration_bounds = array<i64: 1, 2, 1>, scalar_prefetch = 0 : i64, scratch_operands = 4 : i64, tpu.core_type = #tpu.core_type<tc>, window_params = [{transform_indices = @transform_0, window_bounds = array<i64: 1, 4, 256>}, {transform_indices = @transform_1, window_bounds = array<i64: 1, 1, 256>}, {transform_indices = @transform_2, window_bounds = array<i64: 1, 1, 1, 1>}, {transform_indices = @transform_3, window_bounds = array<i64: 1, 1, 4, 1>}, {transform_indices = @transform_4, window_bounds = array<i64: 1, 1, 4, 1>}]} {
    %c0_i32 = arith.constant 0 : i32
    %0 = arith.cmpi eq, %arg2, %c0_i32 : i32
    %1 = arith.extui %0 : i1 to i32
    %c0_i32_0 = arith.constant 0 : i32
    %2 = arith.cmpi ne, %1, %c0_i32_0 : i32
    scf.if %2 {
      %cst_25 = arith.constant 0.000000e+00 : f32
      %42 = vector.broadcast %cst_25 : f32 to vector<1x256xf32>
      %c0_26 = arith.constant 0 : index
      %c0_27 = arith.constant 0 : index
      %43 = vector.load %arg8[%c0_26, %c0_27] : memref<1x256xf32, #tpu.memory_space<vmem>>, vector<1x256xf32>
      tpu.vector_store %arg8[%c0_26, %c0_27], %42 {strides = array<i32>} : memref<1x256xf32, #tpu.memory_space<vmem>>, vector<1x256xf32>,
      %cst_28 = arith.constant 0.000000e+00 : f32
      %44 = vector.broadcast %cst_28 : f32 to vector<4x256xf32>
      %c0_29 = arith.constant 0 : index
      %c0_30 = arith.constant 0 : index
      %45 = vector.load %arg9[%c0_29, %c0_30] : memref<4x256xf32, #tpu.memory_space<vmem>>, vector<4x256xf32>
      tpu.vector_store %arg9[%c0_29, %c0_30], %44 {strides = array<i32>} : memref<4x256xf32, #tpu.memory_space<vmem>>, vector<4x256xf32>,
      %cst_31 = arith.constant 0.000000e+00 : f32
      %46 = vector.broadcast %cst_31 : f32 to vector<4x256xf32>
      %c0_32 = arith.constant 0 : index
      %c0_33 = arith.constant 0 : index
      %47 = vector.load %arg10[%c0_32, %c0_33] : memref<4x256xf32, #tpu.memory_space<vmem>>, vector<4x256xf32>
      tpu.vector_store %arg10[%c0_32, %c0_33], %46 {strides = array<i32>} : memref<4x256xf32, #tpu.memory_space<vmem>>, vector<4x256xf32>,
      %cst_34 = arith.constant 0.000000e+00 : f32
      %48 = vector.broadcast %cst_34 : f32 to vector<4x256xf32>
      %c0_35 = arith.constant 0 : index
      %c0_36 = arith.constant 0 : index
      %49 = vector.load %arg11[%c0_35, %c0_36] : memref<4x256xf32, #tpu.memory_space<vmem>>, vector<4x256xf32>
      tpu.vector_store %arg11[%c0_35, %c0_36], %48 {strides = array<i32>} : memref<4x256xf32, #tpu.memory_space<vmem>>, vector<4x256xf32>,
    } else {
    }
    %c0 = arith.constant 0 : index
    %c0_1 = arith.constant 0 : index
    %c0_2 = arith.constant 0 : index
    %3 = vector.load %arg3[%c0, %c0_1, %c0_2] : memref<1x4x256xf32, #tpu.memory_space<vmem>>, vector<1x4x256xf32>
    %4 = vector.shape_cast %3 : vector<1x4x256xf32> to vector<4x256xf32>
    %c0_3 = arith.constant 0 : index
    %c0_4 = arith.constant 0 : index
    %c0_5 = arith.constant 0 : index
    %5 = vector.load %arg4[%c0_3, %c0_4, %c0_5] : memref<1x1x256xi32, #tpu.memory_space<vmem>>, vector<1x1x256xi32>
    %6 = vector.shape_cast %5 : vector<1x1x256xi32> to vector<1x256xi32>
    %7 = tpu.iota {dimensions = array<i32: 0>} : vector<4x256xi32>
    %8 = vector.broadcast %6 : vector<1x256xi32> to vector<4x256xi32>
    %9 = arith.cmpi eq, %8, %7 : vector<4x256xi32>
    %10 = arith.extui %9 : vector<4x256xi1> to vector<4x256xi32>
    %11 = arith.sitofp %10 : vector<4x256xi32> to vector<4x256xf32>
    %cst = arith.constant dense<0xFF800000> : vector<256xf32>
    %12 = vector.multi_reduction <maximumf>, %4, %cst [0] : vector<4x256xf32> to vector<256xf32>
    %13 = vector.shape_cast %12 : vector<256xf32> to vector<1x256xf32>
    %14 = vector.broadcast %13 : vector<1x256xf32> to vector<4x256xf32>
    %15 = arith.subf %4, %14 : vector<4x256xf32>
    %16 = math.exp %15 : vector<4x256xf32>
    %cst_6 = arith.constant dense<0.000000e+00> : vector<256xf32>
    %17 = vector.multi_reduction <add>, %16, %cst_6 [0] : vector<4x256xf32> to vector<256xf32>
    %18 = vector.shape_cast %17 : vector<256xf32> to vector<1x256xf32>
    %19 = tpu.reciprocal %18 : vector<1x256xf32> -> vector<1x256xf32>
    %20 = vector.broadcast %19 : vector<1x256xf32> to vector<4x256xf32>
    %21 = arith.mulf %16, %20 : vector<4x256xf32>
    %22 = math.log %18 : vector<1x256xf32>
    %23 = arith.addf %13, %22 : vector<1x256xf32>
    %24 = arith.mulf %4, %11 : vector<4x256xf32>
    %c0_7 = arith.constant 0 : index
    %c0_8 = arith.constant 0 : index
    %25 = vector.load %arg8[%c0_7, %c0_8] : memref<1x256xf32, #tpu.memory_space<vmem>>, vector<1x256xf32>
    %26 = arith.addf %25, %23 : vector<1x256xf32>
    %c0_9 = arith.constant 0 : index
    %c0_10 = arith.constant 0 : index
    %27 = vector.load %arg8[%c0_9, %c0_10] : memref<1x256xf32, #tpu.memory_space<vmem>>, vector<1x256xf32>
    tpu.vector_store %arg8[%c0_9, %c0_10], %26 {strides = array<i32>} : memref<1x256xf32, #tpu.memory_space<vmem>>, vector<1x256xf32>,
    %c0_11 = arith.constant 0 : index
    %c0_12 = arith.constant 0 : index
    %28 = vector.load %arg11[%c0_11, %c0_12] : memref<4x256xf32, #tpu.memory_space<vmem>>, vector<4x256xf32>
    %29 = arith.addf %28, %24 : vector<4x256xf32>
    %c0_13 = arith.constant 0 : index
    %c0_14 = arith.constant 0 : index
    %30 = vector.load %arg11[%c0_13, %c0_14] : memref<4x256xf32, #tpu.memory_space<vmem>>, vector<4x256xf32>
    tpu.vector_store %arg11[%c0_13, %c0_14], %29 {strides = array<i32>} : memref<4x256xf32, #tpu.memory_space<vmem>>, vector<4x256xf32>,
    %c0_15 = arith.constant 0 : index
    %c0_16 = arith.constant 0 : index
    %31 = vector.load %arg9[%c0_15, %c0_16] : memref<4x256xf32, #tpu.memory_space<vmem>>, vector<4x256xf32>
    %32 = arith.mulf %21, %11 : vector<4x256xf32>
    %33 = arith.addf %31, %32 : vector<4x256xf32>
    %c0_17 = arith.constant 0 : index
    %c0_18 = arith.constant 0 : index
    %34 = vector.load %arg9[%c0_17, %c0_18] : memref<4x256xf32, #tpu.memory_space<vmem>>, vector<4x256xf32>
    tpu.vector_store %arg9[%c0_17, %c0_18], %33 {strides = array<i32>} : memref<4x256xf32, #tpu.memory_space<vmem>>, vector<4x256xf32>,
    %c0_19 = arith.constant 0 : index
    %c0_20 = arith.constant 0 : index
    %35 = vector.load %arg10[%c0_19, %c0_20] : memref<4x256xf32, #tpu.memory_space<vmem>>, vector<4x256xf32>
    %36 = arith.addf %21, %11 : vector<4x256xf32>
    %37 = arith.addf %35, %36 : vector<4x256xf32>
    %c0_21 = arith.constant 0 : index
    %c0_22 = arith.constant 0 : index
    %38 = vector.load %arg10[%c0_21, %c0_22] : memref<4x256xf32, #tpu.memory_space<vmem>>, vector<4x256xf32>
    tpu.vector_store %arg10[%c0_21, %c0_22], %37 {strides = array<i32>} : memref<4x256xf32, #tpu.memory_space<vmem>>, vector<4x256xf32>,
    %c0_i32_23 = arith.constant 0 : i32
    %39 = arith.cmpi eq, %arg2, %c0_i32_23 : i32
    %40 = arith.extui %39 : i1 to i32
    %c0_i32_24 = arith.constant 0 : i32
    %41 = arith.cmpi ne, %40, %c0_i32_24 : i32
    scf.if %41 {
      %c0_25 = arith.constant 0 : index
      %c0_26 = arith.constant 0 : index
      %42 = vector.load %arg8[%c0_25, %c0_26] : memref<1x256xf32, #tpu.memory_space<vmem>>, vector<1x256xf32>
      %cst_27 = arith.constant dense<0.000000e+00> : vector<1xf32>
      %43 = vector.multi_reduction <add>, %42, %cst_27 [1] : vector<1x256xf32> to vector<1xf32>
      %44 = vector.shape_cast %43 : vector<1xf32> to vector<1x1xf32>
      %c0_28 = arith.constant 0 : index
      %c0_29 = arith.constant 0 : index
      %45 = vector.load %arg11[%c0_28, %c0_29] : memref<4x256xf32, #tpu.memory_space<vmem>>, vector<4x256xf32>
      %cst_30 = arith.constant dense<0.000000e+00> : vector<4xf32>
      %46 = vector.multi_reduction <add>, %45, %cst_30 [1] : vector<4x256xf32> to vector<4xf32>
      %47 = vector.shape_cast %46 : vector<4xf32> to vector<4x1xf32>
      %cst_31 = arith.constant dense<0.000000e+00> : vector<1xf32>
      %48 = vector.multi_reduction <add>, %47, %cst_31 [0] : vector<4x1xf32> to vector<1xf32>
      %49 = vector.shape_cast %48 : vector<1xf32> to vector<1x1xf32>
      %50 = arith.subf %44, %49 : vector<1x1xf32>
      %c0_32 = arith.constant 0 : index
      %c0_33 = arith.constant 0 : index
      %c0_34 = arith.constant 0 : index
      %c0_35 = arith.constant 0 : index
      %51 = vector.load %arg5[%c0_32, %c0_33, %c0_34, %c0_35] : memref<1x1x1x1xf32, #tpu.memory_space<vmem>>, vector<1x1x1x1xf32>
      %52 = vector.shape_cast %51 : vector<1x1x1x1xf32> to vector<1x1xf32>
      %53 = vector.shape_cast %50 : vector<1x1xf32> to vector<1x1x1x1xf32>
      tpu.vector_store %arg5[%c0_32, %c0_33, %c0_34, %c0_35], %53 {strides = array<i32>} : memref<1x1x1x1xf32, #tpu.memory_space<vmem>>, vector<1x1x1x1xf32>,
      %c0_36 = arith.constant 0 : index
      %c0_37 = arith.constant 0 : index
      %54 = vector.load %arg9[%c0_36, %c0_37] : memref<4x256xf32, #tpu.memory_space<vmem>>, vector<4x256xf32>
      %cst_38 = arith.constant dense<0.000000e+00> : vector<4xf32>
      %55 = vector.multi_reduction <add>, %54, %cst_38 [1] : vector<4x256xf32> to vector<4xf32>
      %56 = vector.shape_cast %55 : vector<4xf32> to vector<4x1xf32>
      %c0_39 = arith.constant 0 : index
      %c0_40 = arith.constant 0 : index
      %c0_41 = arith.constant 0 : index
      %c0_42 = arith.constant 0 : index
      %57 = vector.load %arg6[%c0_39, %c0_40, %c0_41, %c0_42] : memref<1x1x4x1xf32, #tpu.memory_space<vmem>>, vector<1x1x4x1xf32>
      %58 = vector.shape_cast %57 : vector<1x1x4x1xf32> to vector<4x1xf32>
      %59 = vector.shape_cast %56 : vector<4x1xf32> to vector<1x1x4x1xf32>
      tpu.vector_store %arg6[%c0_39, %c0_40, %c0_41, %c0_42], %59 {strides = array<i32>} : memref<1x1x4x1xf32, #tpu.memory_space<vmem>>, vector<1x1x4x1xf32>,
      %c0_43 = arith.constant 0 : index
      %c0_44 = arith.constant 0 : index
      %60 = vector.load %arg10[%c0_43, %c0_44] : memref<4x256xf32, #tpu.memory_space<vmem>>, vector<4x256xf32>
      %cst_45 = arith.constant dense<0.000000e+00> : vector<4xf32>
      %61 = vector.multi_reduction <add>, %60, %cst_45 [1] : vector<4x256xf32> to vector<4xf32>
      %62 = vector.shape_cast %61 : vector<4xf32> to vector<4x1xf32>
      %c0_46 = arith.constant 0 : index
      %c0_47 = arith.constant 0 : index
      %c0_48 = arith.constant 0 : index
      %c0_49 = arith.constant 0 : index
      %63 = vector.load %arg7[%c0_46, %c0_47, %c0_48, %c0_49] : memref<1x1x4x1xf32, #tpu.memory_space<vmem>>, vector<1x1x4x1xf32>
      %64 = vector.shape_cast %63 : vector<1x1x4x1xf32> to vector<4x1xf32>
      %65 = vector.shape_cast %62 : vector<4x1xf32> to vector<1x1x4x1xf32>
      tpu.vector_store %arg7[%c0_46, %c0_47, %c0_48, %c0_49], %65 {strides = array<i32>} : memref<1x1x4x1xf32, #tpu.memory_space<vmem>>, vector<1x1x4x1xf32>,
    } else {
    }
    return
  }
  func.func @transform_0(%arg0: i32, %arg1: i32, %arg2: i32) -> (i32, i32, i32) {
    %c1_i32 = arith.constant 1 : i32
    %0 = arith.muli %arg0, %c1_i32 : i32
    %1 = arith.addi %0, %arg2 : i32
    %c0_i32 = arith.constant 0 : i32
    %2 = arith.minsi %1, %c0_i32 : i32
    %c0_i32_0 = arith.constant 0 : i32
    %c0_i32_1 = arith.constant 0 : i32
    return %arg1, %c0_i32_0, %2 : i32, i32, i32
  }
  func.func @transform_1(%arg0: i32, %arg1: i32, %arg2: i32) -> (i32, i32, i32) {
    %c1_i32 = arith.constant 1 : i32
    %0 = arith.muli %arg0, %c1_i32 : i32
    %1 = arith.addi %0, %arg2 : i32
    %c0_i32 = arith.constant 0 : i32
    %2 = arith.minsi %1, %c0_i32 : i32
    %c0_i32_0 = arith.constant 0 : i32
    %c0_i32_1 = arith.constant 0 : i32
    return %arg1, %c0_i32_0, %2 : i32, i32, i32
  }
  func.func @transform_2(%arg0: i32, %arg1: i32, %arg2: i32) -> (i32, i32, i32, i32) {
    %c0_i32 = arith.constant 0 : i32
    %c0_i32_0 = arith.constant 0 : i32
    %c0_i32_1 = arith.constant 0 : i32
    return %arg0, %arg1, %c0_i32, %c0_i32_0 : i32, i32, i32, i32
  }
  func.func @transform_3(%arg0: i32, %arg1: i32, %arg2: i32) -> (i32, i32, i32, i32) {
    %c0_i32 = arith.constant 0 : i32
    %c0_i32_0 = arith.constant 0 : i32
    %c0_i32_1 = arith.constant 0 : i32
    return %arg0, %arg1, %c0_i32, %c0_i32_0 : i32, i32, i32, i32
  }
  func.func @transform_4(%arg0: i32, %arg1: i32, %arg2: i32) -> (i32, i32, i32, i32) {
    %c0_i32 = arith.constant 0 : i32
    %c0_i32_0 = arith.constant 0 : i32
    %c0_i32_1 = arith.constant 0 : i32
    return %arg0, %arg1, %c0_i32, %c0_i32_0 : i32, i32, i32, i32
  }
}

</mosaic_0001>

<llo_original>
// kernel: tpu_custom_call.1
$region0: #{tpu_custom_call.1}
  #allocation0 [shape = 'u32[]', space=smem, size = 0x4, offset = 0x4, fixed_abs, tag = 'smem constant byte address 0x4 - core index']
  #allocation1 [shape = 'u32[144,128]{1,0:T(1,128)}', space=vmem, size = 0x12000, scoped, tag = 'internal scratch']
  #allocation2 [shape = 'f32[1,256]{1,0:T(1,128)}', space=vmem, size = 0x400, scoped, tag = 'scratch operand']
  #allocation3 [shape = 'f32[4,256]{1,0:T(4,128)}', space=vmem, size = 0x1000, scoped, tag = 'scratch operand']
  #allocation4 [shape = 'f32[4,256]{1,0:T(4,128)}', space=vmem, size = 0x1000, scoped, tag = 'scratch operand']
  #allocation5 [shape = 'f32[4,256]{1,0:T(4,128)}', space=vmem, size = 0x1000, scoped, tag = 'scratch operand']
  %s0 = inlined_call_operand.hbm [shape: f32[2,4,256], index: 0, kind: input, shape index: {}]
  %s1 = inlined_call_operand.hbm [shape: s32[2,1,256], index: 1, kind: input, shape index: {}]
  %s2 = inlined_call_operand.vmem [shape: f32[1,2,1,1], index: 2, kind: output, shape index: {0}]
  %s3 = inlined_call_operand.vmem [shape: f32[1,2,4,1], index: 3, kind: output, shape index: {1}]
  %s4 = inlined_call_operand.vmem [shape: f32[1,2,4,1], index: 4, kind: output, shape index: {2}]
  %5 = xla_tuple %s2, %s3, %s4
  %s6 = sld [smem:[#allocation0]]
  $region73: #{tpu_custom_call.1} parent=0
    _
  %s8 = ssub.s32 1, %s6
  %s9 = scalar_select 0, %s8, %s6
  $region1: #{tpu_custom_call.1} parent=0
    #allocation6 [shape = 'u8[8192]{0}', space=vmem, size = 0x2000, scoped, tag = 'input window, operand 0']
    #allocation7 [shape = 's32[2]{0}', space=sflag, size = 0x8, scoped, tag = 'scoped memory for tpu_custom_call.1']
    #allocation8 [shape = 'u8[2048]{0}', space=vmem, size = 0x800, scoped, tag = 'input window, operand 1']
    #allocation9 [shape = 's32[2]{0}', space=sflag, size = 0x8, scoped, tag = 'scoped memory for tpu_custom_call.1']
    %10 = vsyncpa [#allocation7], 0
    %s11 = scalar_lea.sflag [#allocation7], 1
    %12 = vsyncpa %s11, 0
    %13 = vsyncpa [#allocation9], 0
    %s14 = scalar_lea.sflag [#allocation9], 1
    %15 = vsyncpa %s14, 0
    loop: start=0, step=1, limit=4
    $region2: #{tpu_custom_call.1} parent=1 // loop_pre_header
      _
    $region3: #{tpu_custom_call.1} parent=1 // loop_header
      %s17 = sphi 0, %s21
      %p18 = scmp.ge.s32.totalorder %s17, 4
      %s24 = sphi 0, %s43
      %s25 = sphi 0, %s39
      %s26 = sphi 0, %s35
      %s27 = sphi 0, %s24
      %s28 = sphi 0, %s25
      %s29 = sphi 0, %s26
      %s30 = sphi 0, %s27
      %s31 = sphi 0, %s28
      %s32 = sphi 0, %s29
      %s54 = sphi 0, %s56
      %s57 = sphi 0, %s54
      %s58 = sphi 0, %s57
      %s74 = sphi 0, %s58
      %s88 = sphi 0, %s90
      %s91 = sphi 0, %s88
      %s92 = sphi 0, %s91
      %s108 = sphi 0, %s92
      %s116 = sphi 0, %s118
      %s119 = sphi 0, %s116
      %s120 = sphi 0, %s119
      %s136 = sphi 0, %s120
      %s144 = sphi 0, %s146
      %s147 = sphi 0, %s144
      %s148 = sphi 0, %s147
      %s164 = sphi 0, %s148
      %s172 = sphi 0, %s174
      %s175 = sphi 0, %s172
      %s176 = sphi 0, %s175
      %s192 = sphi 0, %s176
    $region4: #{tpu_custom_call.1} parent=1 // loop_header_branch
      %20 = sbr.rel (%p18) target = $region8
    $region5: #{tpu_custom_call.1} parent=1 // loop_body
      %s22 = ssub.s32 %s17, 1
      %s23 = ssub.s32 %s17, 2
      %s33 = sadd.s32 1, %s26
      %p34 = scmp.ge.s32.totalorder %s33, 1
      %s35 = scalar_select %p34, 0, %s33
      %s36 = sadd.s32 1, %s25
      %s37 = scalar_select %p34, %s36, %s25
      %p38 = scmp.ge.s32.totalorder %s37, 2
      %s39 = scalar_select %p38, 0, %s37
      %s40 = sadd.s32 1, %s24
      %s41 = scalar_select %p38, %s40, %s24
      %p42 = scmp.ge.s32.totalorder %s41, 1
      %s43 = scalar_select %p42, 0, %s41
      %s44 = sadd.s32 %s24, %s26
      %p45 = scmp.lt.s32.totalorder %s44, 0
      %s46 = scalar_select %p45, %s44, 0
      %s47 = sadd.s32 %s43, %s35
      %p48 = scmp.lt.s32.totalorder %s47, 0
      %s49 = scalar_select %p48, %s47, 0
      %s50 = ssub.s32 %s25, %s39
      %s51 = ssub.s32 %s46, %s49
      %s52 = sor.u32 %s50, %s51
      %p53 = scmp.eq.s32.totalorder %s52, 0
      %s55 = sadd.s32 %s54, 1
      %s56 = scalar_select %p53, %s54, %s55
      %p59 = pneg %p53
      %p60 = scmp.eq.s32.totalorder %s17, 1
      %p61 = por %p59, %p60
      %p62 = scmp.ne.s32.totalorder %s54, %s57
      %p63 = scmp.eq.s32.totalorder %s17, 0
      %p64 = por %p62, %p63
      %p65 = scmp.ne.s32.totalorder %s54, %s57
      %p66 = scmp.eq.s32.totalorder %s22, 1
      %p67 = por %p65, %p66
      %p68 = scmp.ne.s32.totalorder %s57, %s58
      %p69 = scmp.eq.s32.totalorder %s22, 0
      %p70 = por %p68, %p69
      %p71 = scmp.ne.s32.totalorder %s57, %s58
      %p72 = scmp.eq.s32.totalorder %s23, 1
      %p73 = por %p71, %p72
      %p75 = scmp.ne.s32.totalorder %s58, %s74
      %p76 = scmp.eq.s32.totalorder %s23, 0
      %p77 = por %p75, %p76
      %s78 = sadd.s32 %s24, %s26
      %p79 = scmp.lt.s32.totalorder %s78, 0
      %s80 = scalar_select %p79, %s78, 0
      %s81 = sadd.s32 %s43, %s35
      %p82 = scmp.lt.s32.totalorder %s81, 0
      %s83 = scalar_select %p82, %s81, 0
      %s84 = ssub.s32 %s25, %s39
      %s85 = ssub.s32 %s80, %s83
      %s86 = sor.u32 %s84, %s85
      %p87 = scmp.eq.s32.totalorder %s86, 0
      %s89 = sadd.s32 %s88, 1
      %s90 = scalar_select %p87, %s88, %s89
      %p93 = pneg %p87
      %p94 = scmp.eq.s32.totalorder %s17, 1
      %p95 = por %p93, %p94
      %p96 = scmp.ne.s32.totalorder %s88, %s91
      %p97 = scmp.eq.s32.totalorder %s17, 0
      %p98 = por %p96, %p97
      %p99 = scmp.ne.s32.totalorder %s88, %s91
      %p100 = scmp.eq.s32.totalorder %s22, 1
      %p101 = por %p99, %p100
      %p102 = scmp.ne.s32.totalorder %s91, %s92
      %p103 = scmp.eq.s32.totalorder %s22, 0
      %p104 = por %p102, %p103
      %p105 = scmp.ne.s32.totalorder %s91, %s92
      %p106 = scmp.eq.s32.totalorder %s23, 1
      %p107 = por %p105, %p106
      %p109 = scmp.ne.s32.totalorder %s92, %s108
      %p110 = scmp.eq.s32.totalorder %s23, 0
      %p111 = por %p109, %p110
      %s112 = ssub.s32 %s24, %s43
      %s113 = ssub.s32 %s25, %s39
      %s114 = sor.u32 %s112, %s113
      %p115 = scmp.eq.s32.totalorder %s114, 0
      %s117 = sadd.s32 %s116, 1
      %s118 = scalar_select %p115, %s116, %s117
      %p121 = pneg %p115
      %p122 = scmp.eq.s32.totalorder %s17, 1
      %p123 = por %p121, %p122
      %p124 = scmp.ne.s32.totalorder %s116, %s119
      %p125 = scmp.eq.s32.totalorder %s17, 0
      %p126 = por %p124, %p125
      %p127 = scmp.ne.s32.totalorder %s116, %s119
      %p128 = scmp.eq.s32.totalorder %s22, 1
      %p129 = por %p127, %p128
      %p130 = scmp.ne.s32.totalorder %s119, %s120
      %p131 = scmp.eq.s32.totalorder %s22, 0
      %p132 = por %p130, %p131
      %p133 = scmp.ne.s32.totalorder %s119, %s120
      %p134 = scmp.eq.s32.totalorder %s23, 1
      %p135 = por %p133, %p134
      %p137 = scmp.ne.s32.totalorder %s120, %s136
      %p138 = scmp.eq.s32.totalorder %s23, 0
      %p139 = por %p137, %p138
      %s140 = ssub.s32 %s24, %s43
      %s141 = ssub.s32 %s25, %s39
      %s142 = sor.u32 %s140, %s141
      %p143 = scmp.eq.s32.totalorder %s142, 0
      %s145 = sadd.s32 %s144, 1
      %s146 = scalar_select %p143, %s144, %s145
      %p149 = pneg %p143
      %p150 = scmp.eq.s32.totalorder %s17, 1
      %p151 = por %p149, %p150
      %p152 = scmp.ne.s32.totalorder %s144, %s147
      %p153 = scmp.eq.s32.totalorder %s17, 0
      %p154 = por %p152, %p153
      %p155 = scmp.ne.s32.totalorder %s144, %s147
      %p156 = scmp.eq.s32.totalorder %s22, 1
      %p157 = por %p155, %p156
      %p158 = scmp.ne.s32.totalorder %s147, %s148
      %p159 = scmp.eq.s32.totalorder %s22, 0
      %p160 = por %p158, %p159
      %p161 = scmp.ne.s32.totalorder %s147, %s148
      %p162 = scmp.eq.s32.totalorder %s23, 1
      %p163 = por %p161, %p162
      %p165 = scmp.ne.s32.totalorder %s148, %s164
      %p166 = scmp.eq.s32.totalorder %s23, 0
      %p167 = por %p165, %p166
      %s168 = ssub.s32 %s24, %s43
      %s169 = ssub.s32 %s25, %s39
      %s170 = sor.u32 %s168, %s169
      %p171 = scmp.eq.s32.totalorder %s170, 0
      %s173 = sadd.s32 %s172, 1
      %s174 = scalar_select %p171, %s172, %s173
      %p177 = pneg %p171
      %p178 = scmp.eq.s32.totalorder %s17, 1
      %p179 = por %p177, %p178
      %p180 = scmp.ne.s32.totalorder %s172, %s175
      %p181 = scmp.eq.s32.totalorder %s17, 0
      %p182 = por %p180, %p181
      %p183 = scmp.ne.s32.totalorder %s172, %s175
      %p184 = scmp.eq.s32.totalorder %s22, 1
      %p185 = por %p183, %p184
      %p186 = scmp.ne.s32.totalorder %s175, %s176
      %p187 = scmp.eq.s32.totalorder %s22, 0
      %p188 = por %p186, %p187
      %p189 = scmp.ne.s32.totalorder %s175, %s176
      %p190 = scmp.eq.s32.totalorder %s23, 1
      %p191 = por %p189, %p190
      %p193 = scmp.ne.s32.totalorder %s176, %s192
      %p194 = scmp.eq.s32.totalorder %s23, 0
      %p195 = por %p193, %p194
      %p196 = scmp.le.s32.totalorder 1, %s17
      %p197 = scmp.lt.s32.totalorder %s17, 3
      %p198 = pnand %p196, %p197
      %p199 = pneg %p198
      // Predicated region
      $region9: #{tpu_custom_call.1} parent=5 // pred_check
        _
      $region10: #{tpu_custom_call.1} parent=5 // pred_check_branch
        %201 = sbr.rel (%p198) target = $region12
      $region11: #{tpu_custom_call.1} parent=5 // pred_region
        %s202 = ssub.s32 %s17, 1
      $region12: #{tpu_custom_call.1} parent=5 // pred_fallthru
        _
      %p203 = scmp.lt.s32.totalorder %s17, 2
      // Predicated region
      $region13: #{tpu_custom_call.1} parent=5 // pred_check
        %p204 = pneg %p203
      $region14: #{tpu_custom_call.1} parent=5 // pred_check_branch
        %206 = sbr.rel (%p204) target = $region16
      $region15: #{tpu_custom_call.1} parent=5 // pred_region
        // Predicated region
        $region17: #{tpu_custom_call.1} parent=15 // pred_check
          %p207 = pneg %p64
        $region18: #{tpu_custom_call.1} parent=15 // pred_check_branch
          %209 = sbr.rel (%p207) target = $region20
        $region19: #{tpu_custom_call.1} parent=15 // pred_region
          %s210 = sand.u32 %s54, 1
          %s211 = scalar_lea.sflag [#allocation7], %s210
          %s212 = sand.u32 %s54, 1
          %s213 = smul.addr %s212, 8
          %s214 = scalar_lea.vmem [#allocation6], %s213
          %s215 = sadd.s32 %s24, %s26
          %p216 = scmp.lt.s32.totalorder %s215, 0
          %s217 = scalar_select %p216, %s215, 0
          %s218 = smul.u32 2, %s217
          %s220 = ssub.s32 128, 128
          %221 = vsyncadd %s211, %s220
          %s222 = smul.addr %s25, 2
          %s223 = sadd.s32 %s218, %s222
          %s224 = smul.addr %s223, 64
          %s225 = scalar_lea.hbm %s0, %s224
          %s227 = sshll.u32 %s214, 4
          %s228 = int_to_ptr.vmem [resolvable:$true] %s227
          %230 = dma.hbm_to_vmem [thread:$0]  %s225, 128, %s228, %s211
        $region20: #{tpu_custom_call.1} parent=15 // pred_fallthru
          _
        // Predicated region
        $region21: #{tpu_custom_call.1} parent=15 // pred_check
          %p231 = pneg %p98
        $region22: #{tpu_custom_call.1} parent=15 // pred_check_branch
          %233 = sbr.rel (%p231) target = $region24
        $region23: #{tpu_custom_call.1} parent=15 // pred_region
          %s234 = sand.u32 %s88, 1
          %s235 = scalar_lea.sflag [#allocation9], %s234
          %s236 = sand.u32 %s88, 1
          %s237 = smul.addr %s236, 2
          %s238 = scalar_lea.vmem [#allocation8], %s237
          %s239 = sadd.s32 %s24, %s26
          %p240 = scmp.lt.s32.totalorder %s239, 0
          %s241 = scalar_select %p240, %s239, 0
          %s242 = smul.u32 2, %s241
          %s244 = ssub.s32 32, 32
          %245 = vsyncadd %s235, %s244
          %s246 = smul.addr %s25, 2
          %s247 = sadd.s32 %s242, %s246
          %s248 = smul.addr %s247, 16
          %s249 = scalar_lea.hbm %s1, %s248
          %s251 = sshll.u32 %s238, 4
          %s252 = int_to_ptr.vmem [resolvable:$true] %s251
          %254 = dma.hbm_to_vmem [thread:$0]  %s249, 32, %s252, %s235
        $region24: #{tpu_custom_call.1} parent=15 // pred_fallthru
          _
      $region16: #{tpu_custom_call.1} parent=5 // pred_fallthru
        _
      %p255 = scmp.le.s32.totalorder 1, %s17
      %p256 = scmp.lt.s32.totalorder %s17, 3
      %p257 = pnand %p255, %p256
      %p258 = pneg %p257
      // Predicated region
      $region25: #{tpu_custom_call.1} parent=5 // pred_check
        _
      $region26: #{tpu_custom_call.1} parent=5 // pred_check_branch
        %260 = sbr.rel (%p257) target = $region28
      $region27: #{tpu_custom_call.1} parent=5 // pred_region
        %s261 = ssub.s32 %s17, 1
        %s262 = sand.u32 %s57, 1
        %s263 = scalar_lea.sflag [#allocation7], %s262
        %s264 = sand.u32 %s57, 1
        %s265 = smul.addr %s264, 8
        %s266 = scalar_lea.vmem [#allocation6], %s265
        // Predicated region
        $region29: #{tpu_custom_call.1} parent=27 // pred_check
          %p267 = pneg %p70
        $region30: #{tpu_custom_call.1} parent=27 // pred_check_branch
          %269 = sbr.rel (%p267) target = $region32
        $region31: #{tpu_custom_call.1} parent=27 // pred_region
          %270 = dma.done %s263, 128
        $region32: #{tpu_custom_call.1} parent=27 // pred_fallthru
          _
        %s271 = sand.u32 %s91, 1
        %s272 = scalar_lea.sflag [#allocation9], %s271
        %s273 = sand.u32 %s91, 1
        %s274 = smul.addr %s273, 2
        %s275 = scalar_lea.vmem [#allocation8], %s274
        // Predicated region
        $region33: #{tpu_custom_call.1} parent=27 // pred_check
          %p276 = pneg %p104
        $region34: #{tpu_custom_call.1} parent=27 // pred_check_branch
          %278 = sbr.rel (%p276) target = $region36
        $region35: #{tpu_custom_call.1} parent=27 // pred_region
          %279 = dma.done %s272, 32
        $region36: #{tpu_custom_call.1} parent=27 // pred_fallthru
          _
        %s280 = sand.u32 %s57, 1
        %s281 = scalar_lea.sflag [#allocation7], %s280
        %s282 = sand.u32 %s57, 1
        %s283 = smul.addr %s282, 8
        %s284 = scalar_lea.vmem [#allocation6], %s283
        %p285 = pneg %p70
        %p286 = pneg %p67
        %s287 = sand.u32 %s91, 1
        %s288 = scalar_lea.sflag [#allocation9], %s287
        %s289 = sand.u32 %s91, 1
        %s290 = smul.addr %s289, 2
        %s291 = scalar_lea.vmem [#allocation8], %s290
        %p292 = pneg %p104
        %p293 = pneg %p101
        %p294 = pneg %p132
        %p295 = pneg %p129
        %p296 = scmp.lt.s32.totalorder %s27, 0
        %s297 = scalar_select %p296, %s27, 0
        %p298 = scmp.lt.s32.totalorder %s28, 1
        %s299 = scalar_select %p298, %s28, 1
        %s300 = smul.addr %s297, 2
        %s301 = sadd.s32 %s299, %s300
        %s302 = scalar_lea.vmem %s2, %s301
        %p303 = pneg %p160
        %p304 = pneg %p157
        %p305 = scmp.lt.s32.totalorder %s27, 0
        %s306 = scalar_select %p305, %s27, 0
        %p307 = scmp.lt.s32.totalorder %s28, 1
        %s308 = scalar_select %p307, %s28, 1
        %s309 = smul.addr %s306, 2
        %s310 = sadd.s32 %s308, %s309
        %s311 = smul.addr %s310, 4
        %s312 = scalar_lea.vmem %s3, %s311
        %p313 = pneg %p188
        %p314 = pneg %p185
        %p315 = scmp.lt.s32.totalorder %s27, 0
        %s316 = scalar_select %p315, %s27, 0
        %p317 = scmp.lt.s32.totalorder %s28, 1
        %s318 = scalar_select %p317, %s28, 1
        %s319 = smul.addr %s316, 2
        %s320 = sadd.s32 %s318, %s319
        %s321 = smul.addr %s320, 4
        %s322 = scalar_lea.vmem %s4, %s321
        %s323 = sadd.s32 %s27, %s29
        %p324 = scmp.lt.s32.totalorder %s323, 0
        %s325 = scalar_select %p324, %s323, 0
        %s326 = smul.u32 2, %s325
        %s327 = sadd.s32 %s27, %s29
        %p328 = scmp.lt.s32.totalorder %s327, 0
        %s329 = scalar_select %p328, %s327, 0
        %s330 = smul.u32 2, %s329
        %p331 = scmp.lt.s32.totalorder %s27, 0
        %s332 = scalar_select %p331, %s27, 0
        %p333 = scmp.lt.s32.totalorder %s28, 1
        %s334 = scalar_select %p333, %s28, 1
        %s335 = smul.addr %s332, 2
        %s336 = sadd.s32 %s334, %s335
        %s337 = scalar_lea.vmem %s2, %s336
        %p338 = scmp.lt.s32.totalorder %s27, 0
        %s339 = scalar_select %p338, %s27, 0
        %p340 = scmp.lt.s32.totalorder %s28, 1
        %s341 = scalar_select %p340, %s28, 1
        %s342 = smul.addr %s339, 2
        %s343 = sadd.s32 %s341, %s342
        %s344 = smul.addr %s343, 4
        %s345 = scalar_lea.vmem %s3, %s344
        %p346 = scmp.lt.s32.totalorder %s27, 0
        %s347 = scalar_select %p346, %s27, 0
        %p348 = scmp.lt.s32.totalorder %s28, 1
        %s349 = scalar_select %p348, %s28, 1
        %s350 = smul.addr %s347, 2
        %s351 = sadd.s32 %s349, %s350
        %s352 = smul.addr %s351, 4
        %s353 = scalar_lea.vmem %s4, %s352
        %p354 = scmp.eq.s32.totalorder %s29, 0
        // Predicated region
        $region37: #{tpu_custom_call.1} parent=27 // pred_check
          %p355 = pneg %p354
        $region38: #{tpu_custom_call.1} parent=27 // pred_check_branch
          %357 = sbr.rel (%p355) target = $region40
        $region39: #{tpu_custom_call.1} parent=27 // pred_region
          %v358 = vlaneseq
          %vm359 = vcmp.ge.s32.totalorder %v358, 0
          %vm360 = vcmp.lt.s32.totalorder %v358, 256
          %vm361 = vmand %vm359, %vm360
          %362 = vst.msk [vmem:[#allocation2] sm:$0x3] %vm361, 0.0
          %363 = vst [vmem:[#allocation3] sm:$0xff] 0.0
          %364 = vst [vmem:[#allocation4] sm:$0xff] 0.0
          %365 = vst [vmem:[#allocation5] sm:$0xff] 0.0
        $region40: #{tpu_custom_call.1} parent=27 // pred_fallthru
          _
        %v366 = vld [vmem:[%s266] sm:$0xff]
        %v367 = vld [vmem:[%s275] sm:$0x3]
        %v368 = vlaneseq
        %v369 = vshrl.u32 %v368, 7
        %v370 = vlaneseq
        %v371 = vshrl.u32 %v370, 7
        %v372 = vsub.s32 0, %v371
        %v373 = vrot.slane %v367, %v372
        %v374 = vlaneseq
        %v375 = vshrl.u32 %v374, 7
        %v376 = vsub.s32 1, %v375
        %v377 = vrot.slane %v367, %v376
        %vm378 = vcmp.eq.s32.totalorder %v373, %v369
        %vm379 = vcmp.eq.s32.totalorder %v377, %v369
        %v380 = vsel %vm378, 1, 0
        %v381 = vsel %vm379, 1, 0
        %v382 = vcvt.s32.f32 %v380
        %v383 = vcvt.s32.f32 %v381
        %v385 = vcombine.high %v366, %v366
        %vm387 = vcmask 1043456
        %v388 = vsel %vm387, %v366, -inf
        %v389 = vrot.slane %v388, 4
        %v390 = vmax.f32 %v388, %v389
        %v391 = vrot.slane %v390, 2
        %v392 = vmax.f32 %v390, %v391
        %v393 = vrot.slane %v392, 1
        %v394 = vmax.f32 %v392, %v393
        %v395 = vsel %vm387, %v385, -inf
        %v396 = vrot.slane %v395, 4
        %v397 = vmax.f32 %v395, %v396
        %v398 = vrot.slane %v397, 2
        %v399 = vmax.f32 %v397, %v398
        %v400 = vrot.slane %v399, 1
        %v401 = vmax.f32 %v399, %v400
        %v404 = vcombine.low %v394, %v401
        %v406 = vsub.f32 %v366, %v404
        %v407 = vmul.f32 %v406, 1.442695
        %v408 = vpow.pop %v407
        %v410 = vcombine.high %v408, %v408
        %v412 = vsel %vm387, %v408, 0.0
        %v413 = vrot.slane %v412, 4
        %v414 = vadd.f32 %v412, %v413
        %v415 = vrot.slane %v414, 2
        %v416 = vadd.f32 %v414, %v415
        %v417 = vrot.slane %v416, 1
        %v418 = vadd.f32 %v416, %v417
        %v419 = vsel %vm387, %v410, 0.0
        %v420 = vrot.slane %v419, 4
        %v421 = vadd.f32 %v419, %v420
        %v422 = vrot.slane %v421, 2
        %v423 = vadd.f32 %v421, %v422
        %v424 = vrot.slane %v423, 1
        %v425 = vadd.f32 %v423, %v424
        %v426 = vrcp.pop %v418
        %v427 = vrcp.pop %v425
        %v430 = vcombine.low %v426, %v427
        %v432 = vmul.f32 %v408, %v430
        %v433 = vlog2.pop %v418
        %v434 = vmul.f32 %v433, 0.6931472
        %v435 = vlog2.pop %v425
        %v436 = vmul.f32 %v435, 0.6931472
        %v437 = vadd.f32 %v394, %v434
        %v438 = vadd.f32 %v401, %v436
        %v441 = vcombine.low %v382, %v383
        %v443 = vmul.f32 %v366, %v441
        %v444 = vld [vmem:[#allocation2] sm:$0x3]
        %v447 = vcombine.low %v437, %v438
        %v449 = vunpack.c.l.s4 1966171168
        %v450 = vunpack.c.0.s8 %v449
        %v451 = vlaneseq
        %v452 = vshrl.u32 %v451, 7
        %v453 = vsub.s32 %v450, %v452
        %v454 = vrot.slane %v447, %v453
        %v456 = vunpack.c.l.s4 1966171168
        %v457 = vunpack.c.0.s8 %v456
        %v458 = vlaneseq
        %v459 = vshrl.u32 %v458, 7
        %v460 = vsub.s32 %v457, %v459
        %v461 = vrot.slane %v454, %v460
        %v463 = vadd.f32 %v444, %v461
        %v464 = vlaneseq
        %vm465 = vcmp.ge.s32.totalorder %v464, 0
        %vm466 = vcmp.lt.s32.totalorder %v464, 256
        %vm467 = vmand %vm465, %vm466
        %468 = vst.msk [vmem:[#allocation2] sm:$0x3] %vm467, %v463
        %v469 = vld [vmem:[#allocation5] sm:$0xff]
        %v470 = vadd.f32 %v469, %v443
        %471 = vst [vmem:[#allocation5] sm:$0xff] %v470
        %v472 = vld [vmem:[#allocation3] sm:$0xff]
        %v473 = vmul.f32 %v432, %v441
        %v474 = vadd.f32 %v472, %v473
        %475 = vst [vmem:[#allocation3] sm:$0xff] %v474
        %v476 = vld [vmem:[#allocation4] sm:$0xff]
        %v477 = vadd.f32 %v432, %v441
        %v478 = vadd.f32 %v476, %v477
        %479 = vst [vmem:[#allocation4] sm:$0xff] %v478
        // Predicated region
        $region41: #{tpu_custom_call.1} parent=27 // pred_check
          %p480 = pneg %p354
        $region42: #{tpu_custom_call.1} parent=27 // pred_check_branch
          %482 = sbr.rel (%p480) target = $region44
        $region43: #{tpu_custom_call.1} parent=27 // pred_region
          %v483 = vld [vmem:[#allocation2] sm:$0x3]
          %v485 = vlaneseq
          %v486 = vshrl.u32 %v485, 7
          %v487 = vsub.s32 0, %v486
          %v488 = vrot.slane %v483, %v487
          %v489 = vlaneseq
          %v490 = vshrl.u32 %v489, 7
          %v491 = vsub.s32 1, %v490
          %v492 = vrot.slane %v483, %v491
          %vm495 = vcmask 1040384
          %v496 = vsel %vm495, %v488, 0.0
          %v497 = vsel %vm495, %v492, 0.0
          %v498 = vadd.f32 %v496, %v497
          %499 = vadd.xlane.f32.xlu0 %v498
          %v500 = vpop.xlane.xlu0 %499
          %v501 = vld [vmem:[#allocation5] sm:$0xff]
          %v503 = vcombine.high %v501, %v501
          %v505 = vsel %vm387, %v501, 0.0
          %v506 = vsel %vm387, %v503, 0.0
          %v507 = vadd.f32 %v505, %v506
          %508 = vadd.xlane.f32.xlu0 %v507
          %v509 = vpop.xlane.xlu0 %508
          %v510 = vsel %vm387, %v509, 0.0
          %v511 = vrot.slane %v510, 4
          %v512 = vadd.f32 %v510, %v511
          %v513 = vrot.slane %v512, 2
          %v514 = vadd.f32 %v512, %v513
          %v515 = vrot.slane %v514, 1
          %v516 = vadd.f32 %v514, %v515
          %v517 = vsub.f32 %v500, %v516
          %vm518 = vcmask 0
          %519 = vst.msk [vmem:[%s337] sm:$0x1] %vm518, %v517
          %v520 = vld [vmem:[#allocation3] sm:$0xff]
          %v522 = vcombine.high %v520, %v520
          %v524 = vsel %vm387, %v520, 0.0
          %v525 = vsel %vm387, %v522, 0.0
          %v526 = vadd.f32 %v524, %v525
          %527 = vadd.xlane.f32.xlu0 %v526
          %v528 = vpop.xlane.xlu0 %527
          %vm529 = vcmask 3072
          %530 = vst.msk [vmem:[%s345] sm:$0xf] %vm529, %v528
          %v531 = vld [vmem:[#allocation4] sm:$0xff]
          %v533 = vcombine.high %v531, %v531
          %v535 = vsel %vm387, %v531, 0.0
          %v536 = vsel %vm387, %v533, 0.0
          %v537 = vadd.f32 %v535, %v536
          %538 = vadd.xlane.f32.xlu0 %v537
          %v539 = vpop.xlane.xlu0 %538
          %540 = vst.msk [vmem:[%s353] sm:$0xf] %vm529, %v539
        $region44: #{tpu_custom_call.1} parent=27 // pred_fallthru
          _
        %p541 = scmp.lt.s32.totalorder %s27, 0
        %s542 = scalar_select %p541, %s27, 0
        %p543 = scmp.lt.s32.totalorder %s28, 1
        %s544 = scalar_select %p543, %s28, 1
        %s545 = smul.addr %s542, 2
        %s546 = sadd.s32 %s544, %s545
        %s547 = scalar_lea.vmem %s2, %s546
        %p548 = scmp.lt.s32.totalorder %s27, 0
        %s549 = scalar_select %p548, %s27, 0
        %p550 = scmp.lt.s32.totalorder %s28, 1
        %s551 = scalar_select %p550, %s28, 1
        %s552 = smul.addr %s549, 2
        %s553 = sadd.s32 %s551, %s552
        %s554 = smul.addr %s553, 4
        %s555 = scalar_lea.vmem %s3, %s554
        %p556 = scmp.lt.s32.totalorder %s27, 0
        %s557 = scalar_select %p556, %s27, 0
        %p558 = scmp.lt.s32.totalorder %s28, 1
        %s559 = scalar_select %p558, %s28, 1
        %s560 = smul.addr %s557, 2
        %s561 = sadd.s32 %s559, %s560
        %s562 = smul.addr %s561, 4
        %s563 = scalar_lea.vmem %s4, %s562
        // Predicated region
        $region45: #{tpu_custom_call.1} parent=27 // pred_check
          %p564 = pneg %p129
        $region46: #{tpu_custom_call.1} parent=27 // pred_check_branch
          %566 = sbr.rel (%p564) target = $region48
        $region47: #{tpu_custom_call.1} parent=27 // pred_region
          _
        $region48: #{tpu_custom_call.1} parent=27 // pred_fallthru
          _
        // Predicated region
        $region49: #{tpu_custom_call.1} parent=27 // pred_check
          %p567 = pneg %p157
        $region50: #{tpu_custom_call.1} parent=27 // pred_check_branch
          %569 = sbr.rel (%p567) target = $region52
        $region51: #{tpu_custom_call.1} parent=27 // pred_region
          _
        $region52: #{tpu_custom_call.1} parent=27 // pred_fallthru
          _
        // Predicated region
        $region53: #{tpu_custom_call.1} parent=27 // pred_check
          %p570 = pneg %p185
        $region54: #{tpu_custom_call.1} parent=27 // pred_check_branch
          %572 = sbr.rel (%p570) target = $region56
        $region55: #{tpu_custom_call.1} parent=27 // pred_region
          _
        $region56: #{tpu_custom_call.1} parent=27 // pred_fallthru
          _
      $region28: #{tpu_custom_call.1} parent=5 // pred_fallthru
        _
      %p573 = scmp.le.s32.totalorder 2, %s17
      // Predicated region
      $region57: #{tpu_custom_call.1} parent=5 // pred_check
        %p574 = pneg %p573
      $region58: #{tpu_custom_call.1} parent=5 // pred_check_branch
        %576 = sbr.rel (%p574) target = $region60
      $region59: #{tpu_custom_call.1} parent=5 // pred_region
        %s577 = ssub.s32 %s17, 2
        // Predicated region
        $region61: #{tpu_custom_call.1} parent=59 // pred_check
          %p578 = pneg %p135
        $region62: #{tpu_custom_call.1} parent=59 // pred_check_branch
          %580 = sbr.rel (%p578) target = $region64
        $region63: #{tpu_custom_call.1} parent=59 // pred_region
          %p581 = scmp.lt.s32.totalorder %s30, 0
          %s582 = scalar_select %p581, %s30, 0
          %p583 = scmp.lt.s32.totalorder %s31, 1
          %s584 = scalar_select %p583, %s31, 1
          %s585 = smul.addr %s582, 2
          %s586 = sadd.s32 %s584, %s585
          %s587 = scalar_lea.vmem %s2, %s586
        $region64: #{tpu_custom_call.1} parent=59 // pred_fallthru
          _
        // Predicated region
        $region65: #{tpu_custom_call.1} parent=59 // pred_check
          %p588 = pneg %p163
        $region66: #{tpu_custom_call.1} parent=59 // pred_check_branch
          %590 = sbr.rel (%p588) target = $region68
        $region67: #{tpu_custom_call.1} parent=59 // pred_region
          %p591 = scmp.lt.s32.totalorder %s30, 0
          %s592 = scalar_select %p591, %s30, 0
          %p593 = scmp.lt.s32.totalorder %s31, 1
          %s594 = scalar_select %p593, %s31, 1
          %s595 = smul.addr %s592, 2
          %s596 = sadd.s32 %s594, %s595
          %s597 = smul.addr %s596, 4
          %s598 = scalar_lea.vmem %s3, %s597
        $region68: #{tpu_custom_call.1} parent=59 // pred_fallthru
          _
        // Predicated region
        $region69: #{tpu_custom_call.1} parent=59 // pred_check
          %p599 = pneg %p191
        $region70: #{tpu_custom_call.1} parent=59 // pred_check_branch
          %601 = sbr.rel (%p599) target = $region72
        $region71: #{tpu_custom_call.1} parent=59 // pred_region
          %p602 = scmp.lt.s32.totalorder %s30, 0
          %s603 = scalar_select %p602, %s30, 0
          %p604 = scmp.lt.s32.totalorder %s31, 1
          %s605 = scalar_select %p604, %s31, 1
          %s606 = smul.addr %s603, 2
          %s607 = sadd.s32 %s605, %s606
          %s608 = smul.addr %s607, 4
          %s609 = scalar_lea.vmem %s4, %s608
        $region72: #{tpu_custom_call.1} parent=59 // pred_fallthru
          _
      $region60: #{tpu_custom_call.1} parent=5 // pred_fallthru
        _
    $region6: #{tpu_custom_call.1} parent=1 // loop_footer
      %s21 = sadd.s32 1, %s17
    $region7: #{tpu_custom_call.1} parent=1 // loop_footer_branch
      %16 = sbr.rel target = $region3
    $region8: #{tpu_custom_call.1} parent=1 // loop_exit
      _
    %610 = vsyncpa [#allocation7], 1
    %s611 = scalar_lea.sflag [#allocation7], 1
    %612 = vsyncpa %s611, 1
    %613 = vsyncpa [#allocation9], 1
    %s614 = scalar_lea.sflag [#allocation9], 1
    %615 = vsyncpa %s614, 1

</llo_original>
